<compile_context>
chip_gen: v5e
topology: v5e:2x2
jax: 0.10.0
libtpu: 0.0.40
codegen_flags: <defaults>
</compile_context>

<pallas_src>
import functools

import jax
import jax.numpy as jnp
from jax.experimental import pallas as pl
from jax.experimental.pallas import tpu as pltpu


# Target bytes for one output tile.  Double-buffered output (2x) plus the
# sublane-padded tau tile (2x ~4 MiB) stays well under the 32 MiB default
# scoped VMEM limit on v5e/v6e/v7x, so no explicit vmem_limit_bytes needed.
_TARGET_OUT_TILE_BYTES = 4 * 1024 * 1024


def _round_up(x, m):
    return ((x + m - 1) // m) * m


def _cdiv(a, b):
    return (a + b - 1) // b


def _choose_blocking(n, out_features, out_itemsize):
    """Pick (block_n, n_pad, num_blocks) for the lane (sample) axis."""
    lanes = _round_up(max(n, 1), 128)                     # lane-padded N
    cap = max(
        128,
        (_TARGET_OUT_TILE_BYTES // (out_features * out_itemsize)) // 128 * 128,
    )
    num_blocks = _cdiv(lanes, cap)
    # Give v7x's two TensorCores work whenever there is enough to split; the
    # extra grid step is ~0.35 us, negligible, and harmless on v5e/v6e.
    if num_blocks == 1 and lanes >= 256:
        num_blocks = 2
    block_n = _round_up(_cdiv(lanes, num_blocks), 128)    # multiple of 128
    num_blocks = _cdiv(lanes, block_n)                    # re-derive (>= 2 kept)
    return block_n, block_n * num_blocks, num_blocks


def _cos_compute_dtype(out_dtype):
    """bf16 cos only on chips with a bf16 EUP path (v6e/v7x), never on v5e."""
    if jnp.dtype(out_dtype) != jnp.dtype(jnp.bfloat16):
        return jnp.float32
    kind = jax.devices()[0].device_kind.lower()
    if "v5 lite" in kind or "v5e" in kind or "v5litepod" in kind:
        return jnp.float32   # v5e VPU/EUP have no bf16 path; keep f32 widening
    return jnp.bfloat16


def _cosine_act_kernel(tau_ref, w_ref, b_ref, o_ref, *, cos_dtype):
    # tau_ref: (1, TN)   w_ref: (F, 1)   b_ref: (F, 1)   o_ref: (F, TN)
    tau = tau_ref[...].astype(jnp.float32)     # lane-dense row of time indices
    w = w_ref[...].astype(jnp.float32)
    b = b_ref[...].astype(jnp.float32)
    # K=1 contraction == broadcast outer product; VPU only, no MXU (faster
    # than a degenerate 1-deep matmul on every generation).
    lin = w * tau + b                          # (F, TN) full-vreg VPU op
    f = o_ref.shape[0]
    # (F, 1) sublane selector, broadcast along lanes by the where (cheaper
    # than a full-tile iota + compare per grid step).
    is_cos = jax.lax.broadcasted_iota(jnp.int32, (f, 1), 0) < (f - 1)
    linc = lin.astype(cos_dtype)               # bf16 on v6e/v7x when applicable
    o_ref[...] = jnp.where(is_cos, jnp.cos(linc), linc).astype(o_ref.dtype)


def _cosine_time2vec_t(tau, w, b, w0, b0):
    """Core kernel call. Returns the lane-dense (F, N) layout (no transpose)."""
    n = tau.shape[0]
    out_features = w.shape[1] + 1
    # Promote like the reference (matmul/add promotion), instead of silently
    # following tau.dtype.
    out_dtype = jnp.result_type(tau.dtype, w.dtype, b.dtype, w0.dtype, b0.dtype)

    # Fold (w0, b0) into the same parameter tensors, in (F, 1) orientation.
    w_full = jnp.concatenate([w, w0], axis=1).astype(out_dtype).T   # (F, 1)
    b_full = jnp.concatenate([b, b0], axis=1).astype(out_dtype).T   # (F, 1)

    block_n, n_pad, num_blocks = _choose_blocking(
        n, out_features, jnp.dtype(out_dtype).itemsize
    )

    tau_t = tau.reshape(1, n)
    if n_pad != n:
        tau_t = jnp.pad(tau_t, ((0, 0), (0, n_pad - n)))

    cos_dtype = _cos_compute_dtype(out_dtype)

    out_t = pl.pallas_call(
        functools.partial(_cosine_act_kernel, cos_dtype=cos_dtype),
        out_shape=jax.ShapeDtypeStruct((out_features, n_pad), out_dtype),
        grid_spec=pltpu.PrefetchScalarGridSpec(
            num_scalar_prefetch=0,
            grid=(num_blocks,),
            in_specs=[
                pl.BlockSpec((1, block_n), lambda i: (0, i)),
                pl.BlockSpec((out_features, 1), lambda i: (0, 0)),
                pl.BlockSpec((out_features, 1), lambda i: (0, 0)),
            ],
            out_specs=pl.BlockSpec((out_features, block_n), lambda i: (0, i)),
        ),
        compiler_params=pltpu.CompilerParams(
            dimension_semantics=("parallel",),   # shards grid across v7x's 2 TCs
        ),
    )(tau_t, w_full, b_full)

    return out_t[:, :n]


@jax.jit
def cosine_activation_t(tau, w, b, w0, b0):
    """Preferred entry point: lane-dense (F, N) output, no transpose cost.

    Plumb this layout to the consumer when possible (the wrapper transpose in
    `cosine_activation` is otherwise the single largest HBM cost).
    """
    return _cosine_time2vec_t(tau, w, b, w0, b0)


@jax.jit
def cosine_activation(tau, w, b, w0, b0):
    """Module-contract entry point: (N, F), matching the PyTorch forward."""
    # TODO(synk): if the downstream consumer can take (F, N), use
    # cosine_activation_t and drop this explicit transpose.
    return _cosine_time2vec_t(tau, w, b, w0, b0).T


if __name__ == "__main__":
    out_features = 8

    key = jax.random.PRNGKey(0)
    k_tau, k_w0, k_b0, k_w, k_b = jax.random.split(key, 5)

    # Deterministic "randn"-style parameter init (shapes from __init__).
    w0 = jax.random.normal(k_w0, (1, 1), dtype=jnp.float32)
    b0 = jax.random.normal(k_b0, (1, 1), dtype=jnp.float32)
    w = jax.random.normal(k_w, (1, out_features - 1), dtype=jnp.float32)
    b = jax.random.normal(k_b, (1, out_features - 1), dtype=jnp.float32)

    # Exercise both the single-block path (n=16) and the multi-block /
    # ragged-padding path (n=400 -> two 256-lane tiles).
    for n in (16, 400):
        tau = jax.random.normal(
            jax.random.fold_in(k_tau, n), (n, 1), dtype=jnp.float32
        )

        out = jax.block_until_ready(cosine_activation(tau, w, b, w0, b0))
        out_t = jax.block_until_ready(cosine_activation_t(tau, w, b, w0, b0))

        # Pure-JAX reference (same semantics as the PyTorch module).
        v1 = jnp.cos(tau @ w + b)
        v2 = tau @ w0 + b0
        ref = jnp.concatenate([v1, v2], axis=1)

        assert out.shape == (n, out_features)
        assert out_t.shape == (out_features, n)
        assert jnp.allclose(out, ref, atol=1e-5, rtol=1e-5)
        assert jnp.allclose(out_t, ref.T, atol=1e-5, rtol=1e-5)

    print("KERNEL_OK")
</pallas_src>

<mosaic_0001>
module attributes {stable_mosaic.version = 11 : i64} {
  func.func @_cosine_act_kernel(%arg0: i32, %arg1: memref<1x128xf32, #tpu.memory_space<vmem>>, %arg2: memref<8x1xf32, #tpu.memory_space<vmem>>, %arg3: memref<8x1xf32, #tpu.memory_space<vmem>>, %arg4: memref<8x128xf32, #tpu.memory_space<vmem>>) attributes {dimension_semantics = [#tpu.dimension_semantics<parallel>], iteration_bounds = array<i64: 1>, scalar_prefetch = 0 : i64, scratch_operands = 0 : i64, tpu.core_type = #tpu.core_type<tc>, window_params = [{transform_indices = @transform_0, window_bounds = array<i64: 1, 128>}, {pipeline_mode = #tpu.pipeline_mode<synchronous>, transform_indices = @transform_1, window_bounds = array<i64: 8, 1>}, {pipeline_mode = #tpu.pipeline_mode<synchronous>, transform_indices = @transform_2, window_bounds = array<i64: 8, 1>}, {transform_indices = @transform_3, window_bounds = array<i64: 8, 128>}]} {
    %c0 = arith.constant 0 : index
    %c0_0 = arith.constant 0 : index
    %0 = vector.load %arg1[%c0, %c0_0] : memref<1x128xf32, #tpu.memory_space<vmem>>, vector<1x128xf32>
    %c0_1 = arith.constant 0 : index
    %c0_2 = arith.constant 0 : index
    %1 = vector.load %arg2[%c0_1, %c0_2] : memref<8x1xf32, #tpu.memory_space<vmem>>, vector<8x1xf32>
    %c0_3 = arith.constant 0 : index
    %c0_4 = arith.constant 0 : index
    %2 = vector.load %arg3[%c0_3, %c0_4] : memref<8x1xf32, #tpu.memory_space<vmem>>, vector<8x1xf32>
    %3 = vector.broadcast %1 : vector<8x1xf32> to vector<8x128xf32>
    %4 = vector.broadcast %0 : vector<1x128xf32> to vector<8x128xf32>
    %5 = arith.mulf %3, %4 : vector<8x128xf32>
    %6 = vector.broadcast %2 : vector<8x1xf32> to vector<8x128xf32>
    %7 = arith.addf %5, %6 : vector<8x128xf32>
    %8 = tpu.iota {dimensions = array<i32: 0>} : vector<8x1xi32>
    %c7_i32 = arith.constant 7 : i32
    %9 = vector.broadcast %c7_i32 : i32 to vector<8x1xi32>
    %10 = arith.cmpi slt, %8, %9 : vector<8x1xi32>
    %11 = math.cos %7 : vector<8x128xf32>
    %12 = vector.shape_cast %10 : vector<8x1xi1> to vector<8x1xi1>
    %13 = vector.broadcast %12 : vector<8x1xi1> to vector<8x128xi1>
    %14 = arith.select %13, %11, %7 : vector<8x128xi1>, vector<8x128xf32>
    %c0_5 = arith.constant 0 : index
    %c0_6 = arith.constant 0 : index
    %15 = vector.load %arg4[%c0_5, %c0_6] : memref<8x128xf32, #tpu.memory_space<vmem>>, vector<8x128xf32>
    tpu.vector_store %arg4[%c0_5, %c0_6], %14 {strides = array<i32>} : memref<8x128xf32, #tpu.memory_space<vmem>>, vector<8x128xf32>,
    return
  }
  func.func @transform_0(%arg0: i32) -> (i32, i32) {
    %c0_i32 = arith.constant 0 : i32
    %c0_i32_0 = arith.constant 0 : i32
    return %c0_i32, %arg0 : i32, i32
  }
  func.func @transform_1(%arg0: i32) -> (i32, i32) {
    %c0_i32 = arith.constant 0 : i32
    %c0_i32_0 = arith.constant 0 : i32
    %c0_i32_1 = arith.constant 0 : i32
    return %c0_i32, %c0_i32_0 : i32, i32
  }
  func.func @transform_2(%arg0: i32) -> (i32, i32) {
    %c0_i32 = arith.constant 0 : i32
    %c0_i32_0 = arith.constant 0 : i32
    %c0_i32_1 = arith.constant 0 : i32
    return %c0_i32, %c0_i32_0 : i32, i32
  }
  func.func @transform_3(%arg0: i32) -> (i32, i32) {
    %c0_i32 = arith.constant 0 : i32
    %c0_i32_0 = arith.constant 0 : i32
    return %c0_i32, %arg0 : i32, i32
  }
}

</mosaic_0001>

<llo_original>
// kernel: cosine_activation.1
$region0: #{cosine_activation.1}
  #allocation0 [shape = 'u32[]', space=smem, size = 0x4, offset = 0x4, fixed_abs, tag = 'smem constant byte address 0x4 - core index']
  #allocation1 [shape = 'u32[72,128]{1,0:T(1,128)}', space=vmem, size = 0x9000, scoped, tag = 'internal scratch']
  %s0 = inlined_call_operand.vmem [shape: f32[1,128], index: 0, kind: input, shape index: {}]
  %s1 = inlined_call_operand.vmem [shape: f32[8,1], index: 1, kind: input, shape index: {}]
  %s2 = inlined_call_operand.vmem [shape: f32[8,1], index: 2, kind: input, shape index: {}]
  %s3 = inlined_call_operand.vmem [shape: f32[8,128], index: 3, kind: output, shape index: {}]
  %s4 = sld [smem:[#allocation0]]
  $region22: #{cosine_activation.1} parent=0
    _
  %s6 = ssub.s32 1, %s4
  %s7 = scalar_select 0, %s6, %s4
  // Predicated region
  $region2: #{cosine_activation.1} parent=0 // pred_check
    _
  $region3: #{cosine_activation.1} parent=0 // pred_check_branch
    %9 = sbr.rel (0) target = $region5
  $region4: #{cosine_activation.1} parent=0 // pred_region
    _
  $region5: #{cosine_activation.1} parent=0 // pred_fallthru
    _
  // Predicated region
  $region6: #{cosine_activation.1} parent=0 // pred_check
    _
  $region7: #{cosine_activation.1} parent=0 // pred_check_branch
    %11 = sbr.rel (0) target = $region9
  $region8: #{cosine_activation.1} parent=0 // pred_region
    _
  $region9: #{cosine_activation.1} parent=0 // pred_fallthru
    _
  // Predicated region
  $region10: #{cosine_activation.1} parent=0 // pred_check
    _
  $region11: #{cosine_activation.1} parent=0 // pred_check_branch
    %13 = sbr.rel (0) target = $region13
  $region12: #{cosine_activation.1} parent=0 // pred_region
    _
  $region13: #{cosine_activation.1} parent=0 // pred_fallthru
    _
  %v14 = vld [vmem:[%s0] sm:$0x1]
  %v15 = vld [vmem:[%s1] sm:$0xff]
  %v16 = vld [vmem:[%s2] sm:$0xff]
  %18 = vset.pattern.permute.xlu0 0
  %19 = vperm.xlu0 %18, %v15
  %v20 = vpop.permute.xlu0 %19
  %v23 = vperm.slane %v14, 0
  %v25 = vmul.f32 %v20, %v23
  %27 = vset.pattern.permute.xlu0 0
  %28 = vperm.xlu0 %27, %v16
  %v29 = vpop.permute.xlu0 %28
  %v31 = vadd.f32 %v25, %v29
  %v32 = vlaneseq
  %v33 = vshrl.u32 %v32, 7
  %vm34 = vcmp.lt.s32.totalorder %v33, 7
  %v35 = vand.u32 2147483647, %v31
  %vm36 = vcmp.le.f32.partialorder %v35, 0.7853982
  %vm37 = vcmp.lt.s32.totalorder %v31, 0
  %v38 = vand.u32 %v31, 2139095040
  %v39 = vshrl.u32 %v38, 23
  %v40 = vsub.s32 %v39, 127
  %v41 = vand.u32 2147483647, %v31
  %v42 = vand.u32 %v41, 8388607
  %v43 = vor.u32 %v42, 8388608
  %v44 = vsub.s32 0, %v43
  %v45 = vadd.s32 %v40, 1
  %vm46 = vcmp.gt.s32.totalorder %v45, 0
  %v47 = vsel %vm46, %v45, 0
  %v48 = vshrl.u32 %v47, 5
  %v49 = vand.u32 %v47, 31
  %v50 = vsub.s32 32, %v49
  %v51 = vshrl.u32 683565275, %v50
  %v52 = vshll.u32 683565275, %v49
  %v53 = vshrl.u32 2475754826, %v50
  %v54 = vor.u32 %v52, %v53
  %v55 = vshll.u32 2475754826, %v49
  %v56 = vshrl.u32 2131351028, %v50
  %v57 = vor.u32 %v55, %v56
  %v58 = vshll.u32 2131351028, %v49
  %v59 = vshrl.u32 2102212464, %v50
  %v60 = vor.u32 %v58, %v59
  %v61 = vshll.u32 2102212464, %v49
  %v62 = vshrl.u32 920167782, %v50
  %v63 = vor.u32 %v61, %v62
  %v64 = vshll.u32 920167782, %v49
  %v65 = vshrl.u32 1326507024, %v50
  %v66 = vor.u32 %v64, %v65
  %vm67 = vcmp.lt.s32.totalorder %v48, 1
  %vm68 = vcmp.lt.s32.totalorder %v48, 2
  %vm69 = vcmp.lt.s32.totalorder %v48, 3
  %vm70 = vcmp.lt.s32.totalorder %v48, 4
  %v71 = vsel %vm67, %v51, %v54
  %v72 = vsel %vm70, %v60, 2102212464
  %v73 = vsel %vm69, %v57, %v72
  %v74 = vsel %vm68, %v71, %v73
  %v75 = vsel %vm67, %v54, %v57
  %v76 = vsel %vm70, %v63, 920167782
  %v77 = vsel %vm69, %v60, %v76
  %v78 = vsel %vm68, %v75, %v77
  %v79 = vsel %vm67, %v57, %v60
  %v80 = vsel %vm70, %v66, 1326507024
  %v81 = vsel %vm69, %v63, %v80
  %v82 = vsel %vm68, %v79, %v81
  %v83 = vshll.u32 %v43, 8
  %v84 = vand.u32 %v83, 65535
  %v85 = vshrl.u32 %v83, 16
  %v86 = vand.u32 %v82, 65535
  %v87 = vshrl.u32 %v82, 16
  %v88 = vmul.u32 %v84, %v86
  %v89 = vmul.u32 %v84, %v87
  %v90 = vmul.u32 %v85, %v86
  %v91 = vmul.u32 %v85, %v87
  %v92 = vshll.u32 %v89, 16
  %v93 = vshrl.u32 %v89, 16
  %v94 = vshll.u32 %v90, 16
  %v95 = vshrl.u32 %v90, 16
  %vm96 = vc.u32 %v88, %v92
  %v97 = vsel %vm96, 1, 0
  %v98 = vadd.s32 %v88, %v92
  %v99 = vadd.s32 %v91, %v97
  %vm100 = vc.u32 %v98, %v94
  %v101 = vsel %vm100, 1, 0
  %v102 = vadd.s32 %v98, %v94
  %v103 = vadd.s32 %v99, %v101
  %v104 = vadd.s32 %v103, %v93
  %v105 = vadd.s32 %v104, %v95
  %v106 = vand.u32 %v83, 65535
  %v107 = vshrl.u32 %v83, 16
  %v108 = vand.u32 %v78, 65535
  %v109 = vshrl.u32 %v78, 16
  %v110 = vmul.u32 %v106, %v108
  %v111 = vmul.u32 %v106, %v109
  %v112 = vmul.u32 %v107, %v108
  %v113 = vmul.u32 %v107, %v109
  %v114 = vshll.u32 %v111, 16
  %v115 = vshrl.u32 %v111, 16
  %v116 = vshll.u32 %v112, 16
  %v117 = vshrl.u32 %v112, 16
  %vm118 = vc.u32 %v110, %v114
  %v119 = vsel %vm118, 1, 0
  %v120 = vadd.s32 %v110, %v114
  %v121 = vadd.s32 %v113, %v119
  %vm122 = vc.u32 %v120, %v116
  %v123 = vsel %vm122, 1, 0
  %v124 = vadd.s32 %v120, %v116
  %v125 = vadd.s32 %v121, %v123
  %v126 = vadd.s32 %v125, %v115
  %v127 = vadd.s32 %v126, %v117
  %v128 = vmul.u32 %v83, %v74
  %v129 = vadd.s32 %v105, %v124
  %vm130 = vc.u32 %v105, %v124
  %v131 = vadd.s32 %v127, 1
  %v132 = vsel %vm130, %v131, %v127
  %v133 = vadd.s32 %v128, %v132
  %v134 = vadd.s32 %v133, 536870912
  %v135 = vshrl.u32 %v134, 30
  %v136 = vshll.u32 %v135, 30
  %v137 = vsub.s32 %v133, %v136
  %vm138 = vcmp.lt.s32.totalorder %v137, 0
  %v139 = vsub.s32 0, %v137
  %v140 = vsel %vm138, %v139, %v137
  %v141 = vclz %v140
  %v142 = vsub.s32 %v141, 2
  %vm143 = vcmp.gt.s32.totalorder 0, %v142
  %v144 = vsel %vm143, 0, %v142
  %v145 = vsub.s32 32, %v144
  %v146 = vshll.u32 %v137, %v144
  %v147 = vshrl.u32 %v129, %v145
  %v148 = vor.u32 %v146, %v147
  %v149 = vsub.s32 4294967266, %v144
  %v150 = vadd.s32 %v149, 127
  %v151 = vshll.u32 %v150, 23
  %v152 = vor.u32 4788187, %v151
  %v153 = vand.u32 2147483647, %v152
  %v155 = vcvt.s32.f32 %v148
  %v156 = vmul.f32 %v155, %v153
  %v157 = vxor.u32 %v156, 2147483648
  %v158 = vsel %vm37, %v157, %v156
  %v159 = vsub.s32 4, %v135
  %v160 = vsel %vm37, %v159, %v135
  %v161 = vsel %vm36, %v31, %v158
  %v162 = vsel %vm36, 0, %v160
  %v163 = vmul.f32 %v161, %v161
  %v164 = vmul.f32 %v163, -0.001358992
  %v165 = vadd.f32 %v164, 0.041655596
  %v166 = vmul.f32 %v163, %v165
  %v167 = vadd.f32 %v166, -0.4999988
  %v168 = vmul.f32 %v163, %v167
  %v169 = vadd.f32 1.0, %v168
  %v170 = vmul.f32 %v161, %v161
  %v171 = vmul.f32 %v170, -0.00019511016
  %v172 = vadd.f32 %v171, 0.008332121
  %v173 = vmul.f32 %v170, %v172
  %v174 = vadd.f32 %v173, -0.16666654
  %v175 = vmul.f32 %v170, %v174
  %v176 = vadd.f32 %v175, 1.0
  %v177 = vmul.f32 %v176, %v161
  %vm178 = vweird.f32 %v31
  %v179 = vand.u32 %v162, 3
  %vm180 = vcmp.lt.s32.totalorder %v179, 2
  %vm181 = vcmp.eq.s32.totalorder %v179, 0
  %v182 = vxor.u32 %v177, 2147483648
  %v183 = vsel %vm181, %v169, %v182
  %vm184 = vcmp.eq.s32.totalorder %v179, 2
  %v185 = vxor.u32 %v169, 2147483648
  %v186 = vsel %vm184, %v185, %v177
  %v187 = vsel %vm180, %v183, %v186
  %v188 = vsel %vm178, nan, %v187
  %v189 = vsel %vm34, 1, 0
  %vm190 = vcmp.eq.s32.totalorder %v189, 1
  %v191 = vsel %vm190, %v188, %v31
  %192 = vst [vmem:[%s3] sm:$0xff] %v191
  // Predicated region
  $region14: #{cosine_activation.1} parent=0 // pred_check
    _
  $region15: #{cosine_activation.1} parent=0 // pred_check_branch
    %194 = sbr.rel (0) target = $region17
  $region16: #{cosine_activation.1} parent=0 // pred_region
    _
  $region17: #{cosine_activation.1} parent=0 // pred_fallthru
    _
  // Predicated region
  $region18: #{cosine_activation.1} parent=0 // pred_check
    _
  $region19: #{cosine_activation.1} parent=0 // pred_check_branch
    %196 = sbr.rel (0) target = $region21
  $region20: #{cosine_activation.1} parent=0 // pred_region
    _
  $region21: #{cosine_activation.1} parent=0 // pred_fallthru
    _

</llo_original>
